<compile_context>
chip_gen: v7x
topology: tpu7x:2x2x1
jax: 0.10.0
libtpu: 0.0.40
codegen_flags: <defaults>
</compile_context>

<pallas_src>
import jax
import jax.numpy as jnp
from jax.experimental import pallas as pl
from jax.experimental.pallas import tpu as pltpu

K = 5          # conv kernel size (both convs)
C1 = 5         # conv1 output channels
POOL = 3       # maxpool kernel == stride
PAD = 2        # conv padding
L = 255        # input length (255 / 3 = 85 -> Linear(85, 10))
LP = L // POOL # pooled length = 85
NFC1 = 10      # fc1 output features

# ---- SMEM scalar layout (1-D f32, 57 entries) -------------------------------
_W1_OFF = 0                      # w1[c, k] at  c*K + k          (25 values)
_B1_OFF = 25                     # b1[c]    at 25 + c            (5  values)
_W2_OFF = 30                     # w2[c, k] at 30 + c*K + k      (25 values)
_B2_OFF = 55                     # conv2 bias
_B4_OFF = 56                     # fc2 bias
_N_SCAL = 57

# ---- packed fc-parameter VMEM block (96, 16) f32 -----------------------------
_W3T_R0 = 0                      # rows 0..84 , cols 0..9 : fc1 weight^T (85,10)
_B3_R = 88                       # row  88    , cols 0..9 : fc1 bias     (tile-aligned)
_W4_R = 89                       # row  89    , cols 0..9 : fc2 weight row
_P_ROWS = 96
_P_COLS = 16


def _model_kernel(x3_ref, scal_ref, fc_ref, out_ref):
    """x3_ref: (B, 3, 85) with x3[b, p, t] = x[b, 3t + p] (VMEM).
    scal_ref: (57,) f32 conv/bias scalars (SMEM).
    fc_ref:   (96, 16) packed fc params (VMEM)."""
    B = x3_ref.shape[0]
    f32 = jnp.float32

    # ---- read all scalar parameters once (sld's, scalar slot) ---------------
    w1s = [[scal_ref[_W1_OFF + c * K + k] for k in range(K)] for c in range(C1)]
    b1s = [scal_ref[_B1_OFF + c] for c in range(C1)]
    w2s = [[scal_ref[_W2_OFF + c * K + k] for k in range(K)] for c in range(C1)]
    b2s = scal_ref[_B2_OFF]
    b4s = scal_ref[_B4_OFF]

    # ---- unpack fc params (zero-cost views: tile-aligned rows) --------------
    w3t = fc_ref[_W3T_R0:_W3T_R0 + LP, 0:NFC1]           # (85, 10)
    b3 = fc_ref[_B3_R:_B3_R + 1, 0:NFC1]                 # (1, 10)
    w4r = fc_ref[_W4_R:_W4_R + 1, 0:NFC1]                # (1, 10)

    # ---- rebuild the 7 pooling-phase rows: ph[m][b,0,t] = x[b, 3t + m - 2] ---
    # (zero outside [0, L): this is exactly the PAD=2 zero padding of conv1)
    z1 = jnp.zeros((B, 1, 1), f32)
    z2 = jnp.zeros((B, 1, PAD), f32)
    p0 = x3_ref[:, 0:1, :]                                       # x[3t]
    p1 = x3_ref[:, 1:2, :]                                       # x[3t+1]
    p2 = x3_ref[:, 2:3, :]                                       # x[3t+2]
    ph = [None] * (POOL + K - 1)
    ph[2] = p0
    ph[3] = p1
    ph[4] = p2
    ph[5] = jnp.concatenate([p0[:, :, 1:], z1], axis=2)          # x[3t+3]
    ph[6] = jnp.concatenate([p1[:, :, 1:], z1], axis=2)          # x[3t+4]
    ph[1] = jnp.concatenate([z1, p2[:, :, :-1]], axis=2)         # x[3t-1]
    ph[0] = jnp.concatenate([z1, p1[:, :, :-1]], axis=2)         # x[3t-2]

    # ---- Conv1d(1->5, k=5, pad=2) + ReLU + MaxPool1d(3,3), fused -------------
    # Per output channel with scalar weights -> pure scalar*vector MACs on a
    # single-vreg (B,1,85) shape; no sublane/lane broadcasts anywhere.
    pooled = []                                   # 5 tensors of (B, 1, 85)
    for c in range(C1):
        pc = None
        for j in range(POOL):                     # phase inside pooling window
            acc = ph[j] * w1s[c][0]
            for k in range(1, K):
                acc = acc + ph[j + k] * w1s[c][k]
            acc = jnp.maximum(acc + b1s[c], 0.0)                 # + bias, ReLU
            pc = acc if pc is None else jnp.maximum(pc, acc)     # max-pool
        pooled.append(pc)

    # ---- Conv1d(5->1, k=5, pad=2) + ReLU -------------------------------------
    # Restructured as per-tap channel sums, then 4 in-register lane shifts;
    # removes the cross-sublane reduction entirely.
    s = []                                        # s[k][t] = sum_c w2[c,k]*pooled_c[t]
    for k in range(K):
        sk = pooled[0] * w2s[0][k]
        for c in range(1, C1):
            sk = sk + pooled[c] * w2s[c][k]
        s.append(sk)
    y2 = (s[2]
          + jnp.concatenate([z2, s[0][:, :, :-2]], axis=2)       # tap k=0 -> t-2
          + jnp.concatenate([z1, s[1][:, :, :-1]], axis=2)       # tap k=1 -> t-1
          + jnp.concatenate([s[3][:, :, 1:], z1], axis=2)        # tap k=3 -> t+1
          + jnp.concatenate([s[4][:, :, 2:], z2], axis=2))       # tap k=4 -> t+2
    y2 = jnp.maximum(y2 + b2s, 0.0)                              # (B, 1, 85)
    y2f = y2[:, 0, :]                                            # Flatten -> (B, 85)

    # ---- Linear(85->10) -> ReLU -> Linear(10->1) -> Sigmoid ------------------
    z = jnp.dot(y2f, w3t, preferred_element_type=jnp.float32) + b3   # (B, 10)
    z = jnp.maximum(z, 0.0)
    o = jnp.sum(z * w4r, axis=-1, keepdims=True) + b4s               # (B, 1)
    sig = pl.reciprocal(1.0 + jnp.exp(-o), approx=False)             # exact sigmoid
    out_ref[...] = sig.astype(out_ref.dtype)


def prepare_params(params):
    """One-time host-side packing of all torch-shaped params.

    Returns (scal, fcp):
      scal: (57,) f32  -> SMEM (conv1 w/b, conv2 w/b, fc2 b as scalars)
      fcp : (96,16) f32 -> VMEM (fc1 W^T, fc1 b, fc2 w, tile-aligned rows)
    """
    w1, b1, w2, b2, w3, b3, w4, b4 = params
    scal = jnp.concatenate([
        jnp.asarray(w1, jnp.float32)[:, 0, :].reshape(-1),   # 25: w1[c,k]
        jnp.asarray(b1, jnp.float32).reshape(-1),            # 5 : b1[c]
        jnp.asarray(w2, jnp.float32)[0].reshape(-1),         # 25: w2[c,k]
        jnp.asarray(b2, jnp.float32).reshape(-1),            # 1 : b2
        jnp.asarray(b4, jnp.float32).reshape(-1),            # 1 : b4
    ])
    assert scal.shape == (_N_SCAL,)
    fcp = jnp.zeros((_P_ROWS, _P_COLS), jnp.float32)
    fcp = fcp.at[_W3T_R0:_W3T_R0 + LP, 0:NFC1].set(jnp.asarray(w3, jnp.float32).T)
    fcp = fcp.at[_B3_R, 0:NFC1].set(jnp.asarray(b3, jnp.float32))
    fcp = fcp.at[_W4_R, 0:NFC1].set(jnp.asarray(w4, jnp.float32)[0])
    return scal, fcp


@jax.jit
def model_forward(x, scal, fcp):
    """x: (B, 1, L) float32 (NCW, like PyTorch).  scal/fcp: prepare_params(...).
    Returns (B, 1) float32."""
    B = x.shape[0]
    assert x.shape[-1] == L and L == LP * POOL
    # Non-redundant phase base (B,3,85); allowed to fuse into the pallas_call
    # operand via allow_input_fusion (no separate dispatch / HBM round trip).
    x3 = jnp.transpose(x.reshape(B, LP, POOL).astype(jnp.float32), (0, 2, 1))

    flops = B * (L * C1 * K * 2 + LP * C1 * K * 2 + LP * NFC1 * 2 + NFC1 * 2)
    bytes_accessed = B * L * 4 + _N_SCAL * 4 + _P_ROWS * _P_COLS * 4 + B * 4

    return pl.pallas_call(
        _model_kernel,
        out_shape=jax.ShapeDtypeStruct((B, 1), jnp.float32),
        in_specs=[
            pl.BlockSpec(memory_space=pltpu.MemorySpace.VMEM),   # x3
            pl.BlockSpec(memory_space=pltpu.MemorySpace.SMEM),   # conv scalars
            pl.BlockSpec(memory_space=pltpu.MemorySpace.VMEM),   # packed fc params
        ],
        out_specs=pl.BlockSpec(memory_space=pltpu.MemorySpace.VMEM),
        compiler_params=pltpu.CompilerParams(
            allow_input_fusion=[True, False, False]),
        cost_estimate=pl.CostEstimate(
            flops=flops, transcendentals=B, bytes_accessed=bytes_accessed),
    )(x3, scal, fcp)


def ref_forward(x, params):
    """Pure-JAX reference replicating the PyTorch forward."""
    w1, b1, w2, b2, w3, b3, w4, b4 = params
    dn = ('NCH', 'OIH', 'NCH')
    y = jax.lax.conv_general_dilated(x, w1, (1,), ((PAD, PAD),), dimension_numbers=dn)
    y = jnp.maximum(y + b1[None, :, None], 0.0)
    B, C, Lf = y.shape
    y = y[:, :, :(Lf // POOL) * POOL].reshape(B, C, Lf // POOL, POOL).max(axis=-1)
    y = jax.lax.conv_general_dilated(y, w2, (1,), ((PAD, PAD),), dimension_numbers=dn)
    y = jnp.maximum(y + b2[None, :, None], 0.0)
    y = y.reshape(B, -1)
    y = jnp.maximum(y @ w3.T + b3, 0.0)
    return jax.nn.sigmoid(y @ w4.T + b4)


if __name__ == "__main__":
    key = jax.random.PRNGKey(0)
    ks = jax.random.split(key, 9)
    B = 2
    x = jax.random.normal(ks[0], (B, 1, L), jnp.float32)
    params = (
        0.2 * jax.random.normal(ks[1], (5, 1, 5), jnp.float32),   # conv1.weight
        0.1 * jax.random.normal(ks[2], (5,), jnp.float32),        # conv1.bias
        0.2 * jax.random.normal(ks[3], (1, 5, 5), jnp.float32),   # conv2.weight
        0.1 * jax.random.normal(ks[4], (1,), jnp.float32),        # conv2.bias
        0.2 * jax.random.normal(ks[5], (10, 85), jnp.float32),    # fc1.weight
        0.1 * jax.random.normal(ks[6], (10,), jnp.float32),       # fc1.bias
        0.2 * jax.random.normal(ks[7], (1, 10), jnp.float32),     # fc2.weight
        0.1 * jax.random.normal(ks[8], (1,), jnp.float32),        # fc2.bias
    )

    scal, fcp = prepare_params(params)                     # one-time prep
    scal = jax.block_until_ready(scal)
    fcp = jax.block_until_ready(fcp)

    out = jax.block_until_ready(model_forward(x, scal, fcp))
    ref = ref_forward(x, params)
    assert out.shape == (B, 1), out.shape
    if not jnp.allclose(out, ref, atol=2e-3, rtol=2e-3):
        raise AssertionError(f"kernel/ref mismatch:\n{out}\nvs\n{ref}")
    print("KERNEL_OK")
</pallas_src>

<mosaic_0001>
module attributes {stable_mosaic.version = 11 : i64} {
  func.func @_model_kernel(%arg0: memref<2x3x85xf32, #tpu.memory_space<vmem>>, %arg1: memref<57xf32, #tpu.memory_space<smem>>, %arg2: memref<96x16xf32, #tpu.memory_space<vmem>>, %arg3: memref<2x1xf32, #tpu.memory_space<vmem>>) attributes {dimension_semantics = [], scalar_prefetch = 0 : i64, scratch_operands = 0 : i64, tpu.core_type = #tpu.core_type<tc>} {
    %c0 = arith.constant 0 : index
    %0 = memref.load %arg1[%c0] : memref<57xf32, #tpu.memory_space<smem>>
    %c1 = arith.constant 1 : index
    %1 = memref.load %arg1[%c1] : memref<57xf32, #tpu.memory_space<smem>>
    %c2 = arith.constant 2 : index
    %2 = memref.load %arg1[%c2] : memref<57xf32, #tpu.memory_space<smem>>
    %c3 = arith.constant 3 : index
    %3 = memref.load %arg1[%c3] : memref<57xf32, #tpu.memory_space<smem>>
    %c4 = arith.constant 4 : index
    %4 = memref.load %arg1[%c4] : memref<57xf32, #tpu.memory_space<smem>>
    %c5 = arith.constant 5 : index
    %5 = memref.load %arg1[%c5] : memref<57xf32, #tpu.memory_space<smem>>
    %c6 = arith.constant 6 : index
    %6 = memref.load %arg1[%c6] : memref<57xf32, #tpu.memory_space<smem>>
    %c7 = arith.constant 7 : index
    %7 = memref.load %arg1[%c7] : memref<57xf32, #tpu.memory_space<smem>>
    %c8 = arith.constant 8 : index
    %8 = memref.load %arg1[%c8] : memref<57xf32, #tpu.memory_space<smem>>
    %c9 = arith.constant 9 : index
    %9 = memref.load %arg1[%c9] : memref<57xf32, #tpu.memory_space<smem>>
    %c10 = arith.constant 10 : index
    %10 = memref.load %arg1[%c10] : memref<57xf32, #tpu.memory_space<smem>>
    %c11 = arith.constant 11 : index
    %11 = memref.load %arg1[%c11] : memref<57xf32, #tpu.memory_space<smem>>
    %c12 = arith.constant 12 : index
    %12 = memref.load %arg1[%c12] : memref<57xf32, #tpu.memory_space<smem>>
    %c13 = arith.constant 13 : index
    %13 = memref.load %arg1[%c13] : memref<57xf32, #tpu.memory_space<smem>>
    %c14 = arith.constant 14 : index
    %14 = memref.load %arg1[%c14] : memref<57xf32, #tpu.memory_space<smem>>
    %c15 = arith.constant 15 : index
    %15 = memref.load %arg1[%c15] : memref<57xf32, #tpu.memory_space<smem>>
    %c16 = arith.constant 16 : index
    %16 = memref.load %arg1[%c16] : memref<57xf32, #tpu.memory_space<smem>>
    %c17 = arith.constant 17 : index
    %17 = memref.load %arg1[%c17] : memref<57xf32, #tpu.memory_space<smem>>
    %c18 = arith.constant 18 : index
    %18 = memref.load %arg1[%c18] : memref<57xf32, #tpu.memory_space<smem>>
    %c19 = arith.constant 19 : index
    %19 = memref.load %arg1[%c19] : memref<57xf32, #tpu.memory_space<smem>>
    %c20 = arith.constant 20 : index
    %20 = memref.load %arg1[%c20] : memref<57xf32, #tpu.memory_space<smem>>
    %c21 = arith.constant 21 : index
    %21 = memref.load %arg1[%c21] : memref<57xf32, #tpu.memory_space<smem>>
    %c22 = arith.constant 22 : index
    %22 = memref.load %arg1[%c22] : memref<57xf32, #tpu.memory_space<smem>>
    %c23 = arith.constant 23 : index
    %23 = memref.load %arg1[%c23] : memref<57xf32, #tpu.memory_space<smem>>
    %c24 = arith.constant 24 : index
    %24 = memref.load %arg1[%c24] : memref<57xf32, #tpu.memory_space<smem>>
    %c25 = arith.constant 25 : index
    %25 = memref.load %arg1[%c25] : memref<57xf32, #tpu.memory_space<smem>>
    %c26 = arith.constant 26 : index
    %26 = memref.load %arg1[%c26] : memref<57xf32, #tpu.memory_space<smem>>
    %c27 = arith.constant 27 : index
    %27 = memref.load %arg1[%c27] : memref<57xf32, #tpu.memory_space<smem>>
    %c28 = arith.constant 28 : index
    %28 = memref.load %arg1[%c28] : memref<57xf32, #tpu.memory_space<smem>>
    %c29 = arith.constant 29 : index
    %29 = memref.load %arg1[%c29] : memref<57xf32, #tpu.memory_space<smem>>
    %c30 = arith.constant 30 : index
    %30 = memref.load %arg1[%c30] : memref<57xf32, #tpu.memory_space<smem>>
    %c31 = arith.constant 31 : index
    %31 = memref.load %arg1[%c31] : memref<57xf32, #tpu.memory_space<smem>>
    %c32 = arith.constant 32 : index
    %32 = memref.load %arg1[%c32] : memref<57xf32, #tpu.memory_space<smem>>
    %c33 = arith.constant 33 : index
    %33 = memref.load %arg1[%c33] : memref<57xf32, #tpu.memory_space<smem>>
    %c34 = arith.constant 34 : index
    %34 = memref.load %arg1[%c34] : memref<57xf32, #tpu.memory_space<smem>>
    %c35 = arith.constant 35 : index
    %35 = memref.load %arg1[%c35] : memref<57xf32, #tpu.memory_space<smem>>
    %c36 = arith.constant 36 : index
    %36 = memref.load %arg1[%c36] : memref<57xf32, #tpu.memory_space<smem>>
    %c37 = arith.constant 37 : index
    %37 = memref.load %arg1[%c37] : memref<57xf32, #tpu.memory_space<smem>>
    %c38 = arith.constant 38 : index
    %38 = memref.load %arg1[%c38] : memref<57xf32, #tpu.memory_space<smem>>
    %c39 = arith.constant 39 : index
    %39 = memref.load %arg1[%c39] : memref<57xf32, #tpu.memory_space<smem>>
    %c40 = arith.constant 40 : index
    %40 = memref.load %arg1[%c40] : memref<57xf32, #tpu.memory_space<smem>>
    %c41 = arith.constant 41 : index
    %41 = memref.load %arg1[%c41] : memref<57xf32, #tpu.memory_space<smem>>
    %c42 = arith.constant 42 : index
    %42 = memref.load %arg1[%c42] : memref<57xf32, #tpu.memory_space<smem>>
    %c43 = arith.constant 43 : index
    %43 = memref.load %arg1[%c43] : memref<57xf32, #tpu.memory_space<smem>>
    %c44 = arith.constant 44 : index
    %44 = memref.load %arg1[%c44] : memref<57xf32, #tpu.memory_space<smem>>
    %c45 = arith.constant 45 : index
    %45 = memref.load %arg1[%c45] : memref<57xf32, #tpu.memory_space<smem>>
    %c46 = arith.constant 46 : index
    %46 = memref.load %arg1[%c46] : memref<57xf32, #tpu.memory_space<smem>>
    %c47 = arith.constant 47 : index
    %47 = memref.load %arg1[%c47] : memref<57xf32, #tpu.memory_space<smem>>
    %c48 = arith.constant 48 : index
    %48 = memref.load %arg1[%c48] : memref<57xf32, #tpu.memory_space<smem>>
    %c49 = arith.constant 49 : index
    %49 = memref.load %arg1[%c49] : memref<57xf32, #tpu.memory_space<smem>>
    %c50 = arith.constant 50 : index
    %50 = memref.load %arg1[%c50] : memref<57xf32, #tpu.memory_space<smem>>
    %c51 = arith.constant 51 : index
    %51 = memref.load %arg1[%c51] : memref<57xf32, #tpu.memory_space<smem>>
    %c52 = arith.constant 52 : index
    %52 = memref.load %arg1[%c52] : memref<57xf32, #tpu.memory_space<smem>>
    %c53 = arith.constant 53 : index
    %53 = memref.load %arg1[%c53] : memref<57xf32, #tpu.memory_space<smem>>
    %c54 = arith.constant 54 : index
    %54 = memref.load %arg1[%c54] : memref<57xf32, #tpu.memory_space<smem>>
    %c55 = arith.constant 55 : index
    %55 = memref.load %arg1[%c55] : memref<57xf32, #tpu.memory_space<smem>>
    %c56 = arith.constant 56 : index
    %56 = memref.load %arg1[%c56] : memref<57xf32, #tpu.memory_space<smem>>
    %c0_0 = arith.constant 0 : index
    %c0_1 = arith.constant 0 : index
    %57 = vector.load %arg2[%c0_0, %c0_1] : memref<96x16xf32, #tpu.memory_space<vmem>>, vector<85x10xf32>
    %c88 = arith.constant 88 : index
    %c0_2 = arith.constant 0 : index
    %58 = vector.load %arg2[%c88, %c0_2] : memref<96x16xf32, #tpu.memory_space<vmem>>, vector<1x10xf32>
    %c89 = arith.constant 89 : index
    %c0_3 = arith.constant 0 : index
    %59 = vector.load %arg2[%c89, %c0_3] : memref<96x16xf32, #tpu.memory_space<vmem>>, vector<1x10xf32>
    %cst = arith.constant 0.000000e+00 : f32
    %60 = vector.broadcast %cst : f32 to vector<2x1x1xf32>
    %cst_4 = arith.constant 0.000000e+00 : f32
    %61 = vector.broadcast %cst_4 : f32 to vector<2x1x2xf32>
    %c0_5 = arith.constant 0 : index
    %c0_6 = arith.constant 0 : index
    %c0_7 = arith.constant 0 : index
    %62 = vector.load %arg0[%c0_5, %c0_6, %c0_7] : memref<2x3x85xf32, #tpu.memory_space<vmem>>, vector<2x1x85xf32>
    %c0_8 = arith.constant 0 : index
    %c1_9 = arith.constant 1 : index
    %c0_10 = arith.constant 0 : index
    %63 = vector.load %arg0[%c0_8, %c1_9, %c0_10] : memref<2x3x85xf32, #tpu.memory_space<vmem>>, vector<2x1x85xf32>
    %c0_11 = arith.constant 0 : index
    %c2_12 = arith.constant 2 : index
    %c0_13 = arith.constant 0 : index
    %64 = vector.load %arg0[%c0_11, %c2_12, %c0_13] : memref<2x3x85xf32, #tpu.memory_space<vmem>>, vector<2x1x85xf32>
    %65 = vector.extract_strided_slice %62 {offsets = [0, 0, 1], sizes = [2, 1, 84], strides = [1, 1, 1]} : vector<2x1x85xf32> to vector<2x1x84xf32>
    %66 = tpu.concatenate %65, %60 in 2 : vector<2x1x84xf32>, vector<2x1x1xf32> -> vector<2x1x85xf32>
    %67 = vector.extract_strided_slice %63 {offsets = [0, 0, 1], sizes = [2, 1, 84], strides = [1, 1, 1]} : vector<2x1x85xf32> to vector<2x1x84xf32>
    %68 = tpu.concatenate %67, %60 in 2 : vector<2x1x84xf32>, vector<2x1x1xf32> -> vector<2x1x85xf32>
    %69 = vector.extract_strided_slice %64 {offsets = [0, 0, 0], sizes = [2, 1, 84], strides = [1, 1, 1]} : vector<2x1x85xf32> to vector<2x1x84xf32>
    %70 = tpu.concatenate %60, %69 in 2 : vector<2x1x1xf32>, vector<2x1x84xf32> -> vector<2x1x85xf32>
    %71 = vector.extract_strided_slice %63 {offsets = [0, 0, 0], sizes = [2, 1, 84], strides = [1, 1, 1]} : vector<2x1x85xf32> to vector<2x1x84xf32>
    %72 = tpu.concatenate %60, %71 in 2 : vector<2x1x1xf32>, vector<2x1x84xf32> -> vector<2x1x85xf32>
    %73 = vector.broadcast %0 : f32 to vector<2x1x85xf32>
    %74 = arith.mulf %72, %73 : vector<2x1x85xf32>
    %75 = vector.broadcast %1 : f32 to vector<2x1x85xf32>
    %76 = arith.mulf %70, %75 : vector<2x1x85xf32>
    %77 = arith.addf %74, %76 : vector<2x1x85xf32>
    %78 = vector.broadcast %2 : f32 to vector<2x1x85xf32>
    %79 = arith.mulf %62, %78 : vector<2x1x85xf32>
    %80 = arith.addf %77, %79 : vector<2x1x85xf32>
    %81 = vector.broadcast %3 : f32 to vector<2x1x85xf32>
    %82 = arith.mulf %63, %81 : vector<2x1x85xf32>
    %83 = arith.addf %80, %82 : vector<2x1x85xf32>
    %84 = vector.broadcast %4 : f32 to vector<2x1x85xf32>
    %85 = arith.mulf %64, %84 : vector<2x1x85xf32>
    %86 = arith.addf %83, %85 : vector<2x1x85xf32>
    %87 = vector.broadcast %25 : f32 to vector<2x1x85xf32>
    %88 = arith.addf %86, %87 : vector<2x1x85xf32>
    %cst_14 = arith.constant 0.000000e+00 : f32
    %89 = vector.broadcast %cst_14 : f32 to vector<2x1x85xf32>
    %90 = arith.maximumf %88, %89 : vector<2x1x85xf32>
    %91 = vector.broadcast %0 : f32 to vector<2x1x85xf32>
    %92 = arith.mulf %70, %91 : vector<2x1x85xf32>
    %93 = vector.broadcast %1 : f32 to vector<2x1x85xf32>
    %94 = arith.mulf %62, %93 : vector<2x1x85xf32>
    %95 = arith.addf %92, %94 : vector<2x1x85xf32>
    %96 = vector.broadcast %2 : f32 to vector<2x1x85xf32>
    %97 = arith.mulf %63, %96 : vector<2x1x85xf32>
    %98 = arith.addf %95, %97 : vector<2x1x85xf32>
    %99 = vector.broadcast %3 : f32 to vector<2x1x85xf32>
    %100 = arith.mulf %64, %99 : vector<2x1x85xf32>
    %101 = arith.addf %98, %100 : vector<2x1x85xf32>
    %102 = vector.broadcast %4 : f32 to vector<2x1x85xf32>
    %103 = arith.mulf %66, %102 : vector<2x1x85xf32>
    %104 = arith.addf %101, %103 : vector<2x1x85xf32>
    %105 = vector.broadcast %25 : f32 to vector<2x1x85xf32>
    %106 = arith.addf %104, %105 : vector<2x1x85xf32>
    %cst_15 = arith.constant 0.000000e+00 : f32
    %107 = vector.broadcast %cst_15 : f32 to vector<2x1x85xf32>
    %108 = arith.maximumf %106, %107 : vector<2x1x85xf32>
    %109 = arith.maximumf %90, %108 : vector<2x1x85xf32>
    %110 = vector.broadcast %0 : f32 to vector<2x1x85xf32>
    %111 = arith.mulf %62, %110 : vector<2x1x85xf32>
    %112 = vector.broadcast %1 : f32 to vector<2x1x85xf32>
    %113 = arith.mulf %63, %112 : vector<2x1x85xf32>
    %114 = arith.addf %111, %113 : vector<2x1x85xf32>
    %115 = vector.broadcast %2 : f32 to vector<2x1x85xf32>
    %116 = arith.mulf %64, %115 : vector<2x1x85xf32>
    %117 = arith.addf %114, %116 : vector<2x1x85xf32>
    %118 = vector.broadcast %3 : f32 to vector<2x1x85xf32>
    %119 = arith.mulf %66, %118 : vector<2x1x85xf32>
    %120 = arith.addf %117, %119 : vector<2x1x85xf32>
    %121 = vector.broadcast %4 : f32 to vector<2x1x85xf32>
    %122 = arith.mulf %68, %121 : vector<2x1x85xf32>
    %123 = arith.addf %120, %122 : vector<2x1x85xf32>
    %124 = vector.broadcast %25 : f32 to vector<2x1x85xf32>
    %125 = arith.addf %123, %124 : vector<2x1x85xf32>
    %cst_16 = arith.constant 0.000000e+00 : f32
    %126 = vector.broadcast %cst_16 : f32 to vector<2x1x85xf32>
    %127 = arith.maximumf %125, %126 : vector<2x1x85xf32>
    %128 = arith.maximumf %109, %127 : vector<2x1x85xf32>
    %129 = vector.broadcast %5 : f32 to vector<2x1x85xf32>
    %130 = arith.mulf %72, %129 : vector<2x1x85xf32>
    %131 = vector.broadcast %6 : f32 to vector<2x1x85xf32>
    %132 = arith.mulf %70, %131 : vector<2x1x85xf32>
    %133 = arith.addf %130, %132 : vector<2x1x85xf32>
    %134 = vector.broadcast %7 : f32 to vector<2x1x85xf32>
    %135 = arith.mulf %62, %134 : vector<2x1x85xf32>
    %136 = arith.addf %133, %135 : vector<2x1x85xf32>
    %137 = vector.broadcast %8 : f32 to vector<2x1x85xf32>
    %138 = arith.mulf %63, %137 : vector<2x1x85xf32>
    %139 = arith.addf %136, %138 : vector<2x1x85xf32>
    %140 = vector.broadcast %9 : f32 to vector<2x1x85xf32>
    %141 = arith.mulf %64, %140 : vector<2x1x85xf32>
    %142 = arith.addf %139, %141 : vector<2x1x85xf32>
    %143 = vector.broadcast %26 : f32 to vector<2x1x85xf32>
    %144 = arith.addf %142, %143 : vector<2x1x85xf32>
    %cst_17 = arith.constant 0.000000e+00 : f32
    %145 = vector.broadcast %cst_17 : f32 to vector<2x1x85xf32>
    %146 = arith.maximumf %144, %145 : vector<2x1x85xf32>
    %147 = vector.broadcast %5 : f32 to vector<2x1x85xf32>
    %148 = arith.mulf %70, %147 : vector<2x1x85xf32>
    %149 = vector.broadcast %6 : f32 to vector<2x1x85xf32>
    %150 = arith.mulf %62, %149 : vector<2x1x85xf32>
    %151 = arith.addf %148, %150 : vector<2x1x85xf32>
    %152 = vector.broadcast %7 : f32 to vector<2x1x85xf32>
    %153 = arith.mulf %63, %152 : vector<2x1x85xf32>
    %154 = arith.addf %151, %153 : vector<2x1x85xf32>
    %155 = vector.broadcast %8 : f32 to vector<2x1x85xf32>
    %156 = arith.mulf %64, %155 : vector<2x1x85xf32>
    %157 = arith.addf %154, %156 : vector<2x1x85xf32>
    %158 = vector.broadcast %9 : f32 to vector<2x1x85xf32>
    %159 = arith.mulf %66, %158 : vector<2x1x85xf32>
    %160 = arith.addf %157, %159 : vector<2x1x85xf32>
    %161 = vector.broadcast %26 : f32 to vector<2x1x85xf32>
    %162 = arith.addf %160, %161 : vector<2x1x85xf32>
    %cst_18 = arith.constant 0.000000e+00 : f32
    %163 = vector.broadcast %cst_18 : f32 to vector<2x1x85xf32>
    %164 = arith.maximumf %162, %163 : vector<2x1x85xf32>
    %165 = arith.maximumf %146, %164 : vector<2x1x85xf32>
    %166 = vector.broadcast %5 : f32 to vector<2x1x85xf32>
    %167 = arith.mulf %62, %166 : vector<2x1x85xf32>
    %168 = vector.broadcast %6 : f32 to vector<2x1x85xf32>
    %169 = arith.mulf %63, %168 : vector<2x1x85xf32>
    %170 = arith.addf %167, %169 : vector<2x1x85xf32>
    %171 = vector.broadcast %7 : f32 to vector<2x1x85xf32>
    %172 = arith.mulf %64, %171 : vector<2x1x85xf32>
    %173 = arith.addf %170, %172 : vector<2x1x85xf32>
    %174 = vector.broadcast %8 : f32 to vector<2x1x85xf32>
    %175 = arith.mulf %66, %174 : vector<2x1x85xf32>
    %176 = arith.addf %173, %175 : vector<2x1x85xf32>
    %177 = vector.broadcast %9 : f32 to vector<2x1x85xf32>
    %178 = arith.mulf %68, %177 : vector<2x1x85xf32>
    %179 = arith.addf %176, %178 : vector<2x1x85xf32>
    %180 = vector.broadcast %26 : f32 to vector<2x1x85xf32>
    %181 = arith.addf %179, %180 : vector<2x1x85xf32>
    %cst_19 = arith.constant 0.000000e+00 : f32
    %182 = vector.broadcast %cst_19 : f32 to vector<2x1x85xf32>
    %183 = arith.maximumf %181, %182 : vector<2x1x85xf32>
    %184 = arith.maximumf %165, %183 : vector<2x1x85xf32>
    %185 = vector.broadcast %10 : f32 to vector<2x1x85xf32>
    %186 = arith.mulf %72, %185 : vector<2x1x85xf32>
    %187 = vector.broadcast %11 : f32 to vector<2x1x85xf32>
    %188 = arith.mulf %70, %187 : vector<2x1x85xf32>
    %189 = arith.addf %186, %188 : vector<2x1x85xf32>
    %190 = vector.broadcast %12 : f32 to vector<2x1x85xf32>
    %191 = arith.mulf %62, %190 : vector<2x1x85xf32>
    %192 = arith.addf %189, %191 : vector<2x1x85xf32>
    %193 = vector.broadcast %13 : f32 to vector<2x1x85xf32>
    %194 = arith.mulf %63, %193 : vector<2x1x85xf32>
    %195 = arith.addf %192, %194 : vector<2x1x85xf32>
    %196 = vector.broadcast %14 : f32 to vector<2x1x85xf32>
    %197 = arith.mulf %64, %196 : vector<2x1x85xf32>
    %198 = arith.addf %195, %197 : vector<2x1x85xf32>
    %199 = vector.broadcast %27 : f32 to vector<2x1x85xf32>
    %200 = arith.addf %198, %199 : vector<2x1x85xf32>
    %cst_20 = arith.constant 0.000000e+00 : f32
    %201 = vector.broadcast %cst_20 : f32 to vector<2x1x85xf32>
    %202 = arith.maximumf %200, %201 : vector<2x1x85xf32>
    %203 = vector.broadcast %10 : f32 to vector<2x1x85xf32>
    %204 = arith.mulf %70, %203 : vector<2x1x85xf32>
    %205 = vector.broadcast %11 : f32 to vector<2x1x85xf32>
    %206 = arith.mulf %62, %205 : vector<2x1x85xf32>
    %207 = arith.addf %204, %206 : vector<2x1x85xf32>
    %208 = vector.broadcast %12 : f32 to vector<2x1x85xf32>
    %209 = arith.mulf %63, %208 : vector<2x1x85xf32>
    %210 = arith.addf %207, %209 : vector<2x1x85xf32>
    %211 = vector.broadcast %13 : f32 to vector<2x1x85xf32>
    %212 = arith.mulf %64, %211 : vector<2x1x85xf32>
    %213 = arith.addf %210, %212 : vector<2x1x85xf32>
    %214 = vector.broadcast %14 : f32 to vector<2x1x85xf32>
    %215 = arith.mulf %66, %214 : vector<2x1x85xf32>
    %216 = arith.addf %213, %215 : vector<2x1x85xf32>
    %217 = vector.broadcast %27 : f32 to vector<2x1x85xf32>
    %218 = arith.addf %216, %217 : vector<2x1x85xf32>
    %cst_21 = arith.constant 0.000000e+00 : f32
    %219 = vector.broadcast %cst_21 : f32 to vector<2x1x85xf32>
    %220 = arith.maximumf %218, %219 : vector<2x1x85xf32>
    %221 = arith.maximumf %202, %220 : vector<2x1x85xf32>
    %222 = vector.broadcast %10 : f32 to vector<2x1x85xf32>
    %223 = arith.mulf %62, %222 : vector<2x1x85xf32>
    %224 = vector.broadcast %11 : f32 to vector<2x1x85xf32>
    %225 = arith.mulf %63, %224 : vector<2x1x85xf32>
    %226 = arith.addf %223, %225 : vector<2x1x85xf32>
    %227 = vector.broadcast %12 : f32 to vector<2x1x85xf32>
    %228 = arith.mulf %64, %227 : vector<2x1x85xf32>
    %229 = arith.addf %226, %228 : vector<2x1x85xf32>
    %230 = vector.broadcast %13 : f32 to vector<2x1x85xf32>
    %231 = arith.mulf %66, %230 : vector<2x1x85xf32>
    %232 = arith.addf %229, %231 : vector<2x1x85xf32>
    %233 = vector.broadcast %14 : f32 to vector<2x1x85xf32>
    %234 = arith.mulf %68, %233 : vector<2x1x85xf32>
    %235 = arith.addf %232, %234 : vector<2x1x85xf32>
    %236 = vector.broadcast %27 : f32 to vector<2x1x85xf32>
    %237 = arith.addf %235, %236 : vector<2x1x85xf32>
    %cst_22 = arith.constant 0.000000e+00 : f32
    %238 = vector.broadcast %cst_22 : f32 to vector<2x1x85xf32>
    %239 = arith.maximumf %237, %238 : vector<2x1x85xf32>
    %240 = arith.maximumf %221, %239 : vector<2x1x85xf32>
    %241 = vector.broadcast %15 : f32 to vector<2x1x85xf32>
    %242 = arith.mulf %72, %241 : vector<2x1x85xf32>
    %243 = vector.broadcast %16 : f32 to vector<2x1x85xf32>
    %244 = arith.mulf %70, %243 : vector<2x1x85xf32>
    %245 = arith.addf %242, %244 : vector<2x1x85xf32>
    %246 = vector.broadcast %17 : f32 to vector<2x1x85xf32>
    %247 = arith.mulf %62, %246 : vector<2x1x85xf32>
    %248 = arith.addf %245, %247 : vector<2x1x85xf32>
    %249 = vector.broadcast %18 : f32 to vector<2x1x85xf32>
    %250 = arith.mulf %63, %249 : vector<2x1x85xf32>
    %251 = arith.addf %248, %250 : vector<2x1x85xf32>
    %252 = vector.broadcast %19 : f32 to vector<2x1x85xf32>
    %253 = arith.mulf %64, %252 : vector<2x1x85xf32>
    %254 = arith.addf %251, %253 : vector<2x1x85xf32>
    %255 = vector.broadcast %28 : f32 to vector<2x1x85xf32>
    %256 = arith.addf %254, %255 : vector<2x1x85xf32>
    %cst_23 = arith.constant 0.000000e+00 : f32
    %257 = vector.broadcast %cst_23 : f32 to vector<2x1x85xf32>
    %258 = arith.maximumf %256, %257 : vector<2x1x85xf32>
    %259 = vector.broadcast %15 : f32 to vector<2x1x85xf32>
    %260 = arith.mulf %70, %259 : vector<2x1x85xf32>
    %261 = vector.broadcast %16 : f32 to vector<2x1x85xf32>
    %262 = arith.mulf %62, %261 : vector<2x1x85xf32>
    %263 = arith.addf %260, %262 : vector<2x1x85xf32>
    %264 = vector.broadcast %17 : f32 to vector<2x1x85xf32>
    %265 = arith.mulf %63, %264 : vector<2x1x85xf32>
    %266 = arith.addf %263, %265 : vector<2x1x85xf32>
    %267 = vector.broadcast %18 : f32 to vector<2x1x85xf32>
    %268 = arith.mulf %64, %267 : vector<2x1x85xf32>
    %269 = arith.addf %266, %268 : vector<2x1x85xf32>
    %270 = vector.broadcast %19 : f32 to vector<2x1x85xf32>
    %271 = arith.mulf %66, %270 : vector<2x1x85xf32>
    %272 = arith.addf %269, %271 : vector<2x1x85xf32>
    %273 = vector.broadcast %28 : f32 to vector<2x1x85xf32>
    %274 = arith.addf %272, %273 : vector<2x1x85xf32>
    %cst_24 = arith.constant 0.000000e+00 : f32
    %275 = vector.broadcast %cst_24 : f32 to vector<2x1x85xf32>
    %276 = arith.maximumf %274, %275 : vector<2x1x85xf32>
    %277 = arith.maximumf %258, %276 : vector<2x1x85xf32>
    %278 = vector.broadcast %15 : f32 to vector<2x1x85xf32>
    %279 = arith.mulf %62, %278 : vector<2x1x85xf32>
    %280 = vector.broadcast %16 : f32 to vector<2x1x85xf32>
    %281 = arith.mulf %63, %280 : vector<2x1x85xf32>
    %282 = arith.addf %279, %281 : vector<2x1x85xf32>
    %283 = vector.broadcast %17 : f32 to vector<2x1x85xf32>
    %284 = arith.mulf %64, %283 : vector<2x1x85xf32>
    %285 = arith.addf %282, %284 : vector<2x1x85xf32>
    %286 = vector.broadcast %18 : f32 to vector<2x1x85xf32>
    %287 = arith.mulf %66, %286 : vector<2x1x85xf32>
    %288 = arith.addf %285, %287 : vector<2x1x85xf32>
    %289 = vector.broadcast %19 : f32 to vector<2x1x85xf32>
    %290 = arith.mulf %68, %289 : vector<2x1x85xf32>
    %291 = arith.addf %288, %290 : vector<2x1x85xf32>
    %292 = vector.broadcast %28 : f32 to vector<2x1x85xf32>
    %293 = arith.addf %291, %292 : vector<2x1x85xf32>
    %cst_25 = arith.constant 0.000000e+00 : f32
    %294 = vector.broadcast %cst_25 : f32 to vector<2x1x85xf32>
    %295 = arith.maximumf %293, %294 : vector<2x1x85xf32>
    %296 = arith.maximumf %277, %295 : vector<2x1x85xf32>
    %297 = vector.broadcast %20 : f32 to vector<2x1x85xf32>
    %298 = arith.mulf %72, %297 : vector<2x1x85xf32>
    %299 = vector.broadcast %21 : f32 to vector<2x1x85xf32>
    %300 = arith.mulf %70, %299 : vector<2x1x85xf32>
    %301 = arith.addf %298, %300 : vector<2x1x85xf32>
    %302 = vector.broadcast %22 : f32 to vector<2x1x85xf32>
    %303 = arith.mulf %62, %302 : vector<2x1x85xf32>
    %304 = arith.addf %301, %303 : vector<2x1x85xf32>
    %305 = vector.broadcast %23 : f32 to vector<2x1x85xf32>
    %306 = arith.mulf %63, %305 : vector<2x1x85xf32>
    %307 = arith.addf %304, %306 : vector<2x1x85xf32>
    %308 = vector.broadcast %24 : f32 to vector<2x1x85xf32>
    %309 = arith.mulf %64, %308 : vector<2x1x85xf32>
    %310 = arith.addf %307, %309 : vector<2x1x85xf32>
    %311 = vector.broadcast %29 : f32 to vector<2x1x85xf32>
    %312 = arith.addf %310, %311 : vector<2x1x85xf32>
    %cst_26 = arith.constant 0.000000e+00 : f32
    %313 = vector.broadcast %cst_26 : f32 to vector<2x1x85xf32>
    %314 = arith.maximumf %312, %313 : vector<2x1x85xf32>
    %315 = vector.broadcast %20 : f32 to vector<2x1x85xf32>
    %316 = arith.mulf %70, %315 : vector<2x1x85xf32>
    %317 = vector.broadcast %21 : f32 to vector<2x1x85xf32>
    %318 = arith.mulf %62, %317 : vector<2x1x85xf32>
    %319 = arith.addf %316, %318 : vector<2x1x85xf32>
    %320 = vector.broadcast %22 : f32 to vector<2x1x85xf32>
    %321 = arith.mulf %63, %320 : vector<2x1x85xf32>
    %322 = arith.addf %319, %321 : vector<2x1x85xf32>
    %323 = vector.broadcast %23 : f32 to vector<2x1x85xf32>
    %324 = arith.mulf %64, %323 : vector<2x1x85xf32>
    %325 = arith.addf %322, %324 : vector<2x1x85xf32>
    %326 = vector.broadcast %24 : f32 to vector<2x1x85xf32>
    %327 = arith.mulf %66, %326 : vector<2x1x85xf32>
    %328 = arith.addf %325, %327 : vector<2x1x85xf32>
    %329 = vector.broadcast %29 : f32 to vector<2x1x85xf32>
    %330 = arith.addf %328, %329 : vector<2x1x85xf32>
    %cst_27 = arith.constant 0.000000e+00 : f32
    %331 = vector.broadcast %cst_27 : f32 to vector<2x1x85xf32>
    %332 = arith.maximumf %330, %331 : vector<2x1x85xf32>
    %333 = arith.maximumf %314, %332 : vector<2x1x85xf32>
    %334 = vector.broadcast %20 : f32 to vector<2x1x85xf32>
    %335 = arith.mulf %62, %334 : vector<2x1x85xf32>
    %336 = vector.broadcast %21 : f32 to vector<2x1x85xf32>
    %337 = arith.mulf %63, %336 : vector<2x1x85xf32>
    %338 = arith.addf %335, %337 : vector<2x1x85xf32>
    %339 = vector.broadcast %22 : f32 to vector<2x1x85xf32>
    %340 = arith.mulf %64, %339 : vector<2x1x85xf32>
    %341 = arith.addf %338, %340 : vector<2x1x85xf32>
    %342 = vector.broadcast %23 : f32 to vector<2x1x85xf32>
    %343 = arith.mulf %66, %342 : vector<2x1x85xf32>
    %344 = arith.addf %341, %343 : vector<2x1x85xf32>
    %345 = vector.broadcast %24 : f32 to vector<2x1x85xf32>
    %346 = arith.mulf %68, %345 : vector<2x1x85xf32>
    %347 = arith.addf %344, %346 : vector<2x1x85xf32>
    %348 = vector.broadcast %29 : f32 to vector<2x1x85xf32>
    %349 = arith.addf %347, %348 : vector<2x1x85xf32>
    %cst_28 = arith.constant 0.000000e+00 : f32
    %350 = vector.broadcast %cst_28 : f32 to vector<2x1x85xf32>
    %351 = arith.maximumf %349, %350 : vector<2x1x85xf32>
    %352 = arith.maximumf %333, %351 : vector<2x1x85xf32>
    %353 = vector.broadcast %30 : f32 to vector<2x1x85xf32>
    %354 = arith.mulf %128, %353 : vector<2x1x85xf32>
    %355 = vector.broadcast %35 : f32 to vector<2x1x85xf32>
    %356 = arith.mulf %184, %355 : vector<2x1x85xf32>
    %357 = arith.addf %354, %356 : vector<2x1x85xf32>
    %358 = vector.broadcast %40 : f32 to vector<2x1x85xf32>
    %359 = arith.mulf %240, %358 : vector<2x1x85xf32>
    %360 = arith.addf %357, %359 : vector<2x1x85xf32>
    %361 = vector.broadcast %45 : f32 to vector<2x1x85xf32>
    %362 = arith.mulf %296, %361 : vector<2x1x85xf32>
    %363 = arith.addf %360, %362 : vector<2x1x85xf32>
    %364 = vector.broadcast %50 : f32 to vector<2x1x85xf32>
    %365 = arith.mulf %352, %364 : vector<2x1x85xf32>
    %366 = arith.addf %363, %365 : vector<2x1x85xf32>
    %367 = vector.broadcast %31 : f32 to vector<2x1x85xf32>
    %368 = arith.mulf %128, %367 : vector<2x1x85xf32>
    %369 = vector.broadcast %36 : f32 to vector<2x1x85xf32>
    %370 = arith.mulf %184, %369 : vector<2x1x85xf32>
    %371 = arith.addf %368, %370 : vector<2x1x85xf32>
    %372 = vector.broadcast %41 : f32 to vector<2x1x85xf32>
    %373 = arith.mulf %240, %372 : vector<2x1x85xf32>
    %374 = arith.addf %371, %373 : vector<2x1x85xf32>
    %375 = vector.broadcast %46 : f32 to vector<2x1x85xf32>
    %376 = arith.mulf %296, %375 : vector<2x1x85xf32>
    %377 = arith.addf %374, %376 : vector<2x1x85xf32>
    %378 = vector.broadcast %51 : f32 to vector<2x1x85xf32>
    %379 = arith.mulf %352, %378 : vector<2x1x85xf32>
    %380 = arith.addf %377, %379 : vector<2x1x85xf32>
    %381 = vector.broadcast %32 : f32 to vector<2x1x85xf32>
    %382 = arith.mulf %128, %381 : vector<2x1x85xf32>
    %383 = vector.broadcast %37 : f32 to vector<2x1x85xf32>
    %384 = arith.mulf %184, %383 : vector<2x1x85xf32>
    %385 = arith.addf %382, %384 : vector<2x1x85xf32>
    %386 = vector.broadcast %42 : f32 to vector<2x1x85xf32>
    %387 = arith.mulf %240, %386 : vector<2x1x85xf32>
    %388 = arith.addf %385, %387 : vector<2x1x85xf32>
    %389 = vector.broadcast %47 : f32 to vector<2x1x85xf32>
    %390 = arith.mulf %296, %389 : vector<2x1x85xf32>
    %391 = arith.addf %388, %390 : vector<2x1x85xf32>
    %392 = vector.broadcast %52 : f32 to vector<2x1x85xf32>
    %393 = arith.mulf %352, %392 : vector<2x1x85xf32>
    %394 = arith.addf %391, %393 : vector<2x1x85xf32>
    %395 = vector.broadcast %33 : f32 to vector<2x1x85xf32>
    %396 = arith.mulf %128, %395 : vector<2x1x85xf32>
    %397 = vector.broadcast %38 : f32 to vector<2x1x85xf32>
    %398 = arith.mulf %184, %397 : vector<2x1x85xf32>
    %399 = arith.addf %396, %398 : vector<2x1x85xf32>
    %400 = vector.broadcast %43 : f32 to vector<2x1x85xf32>
    %401 = arith.mulf %240, %400 : vector<2x1x85xf32>
    %402 = arith.addf %399, %401 : vector<2x1x85xf32>
    %403 = vector.broadcast %48 : f32 to vector<2x1x85xf32>
    %404 = arith.mulf %296, %403 : vector<2x1x85xf32>
    %405 = arith.addf %402, %404 : vector<2x1x85xf32>
    %406 = vector.broadcast %53 : f32 to vector<2x1x85xf32>
    %407 = arith.mulf %352, %406 : vector<2x1x85xf32>
    %408 = arith.addf %405, %407 : vector<2x1x85xf32>
    %409 = vector.broadcast %34 : f32 to vector<2x1x85xf32>
    %410 = arith.mulf %128, %409 : vector<2x1x85xf32>
    %411 = vector.broadcast %39 : f32 to vector<2x1x85xf32>
    %412 = arith.mulf %184, %411 : vector<2x1x85xf32>
    %413 = arith.addf %410, %412 : vector<2x1x85xf32>
    %414 = vector.broadcast %44 : f32 to vector<2x1x85xf32>
    %415 = arith.mulf %240, %414 : vector<2x1x85xf32>
    %416 = arith.addf %413, %415 : vector<2x1x85xf32>
    %417 = vector.broadcast %49 : f32 to vector<2x1x85xf32>
    %418 = arith.mulf %296, %417 : vector<2x1x85xf32>
    %419 = arith.addf %416, %418 : vector<2x1x85xf32>
    %420 = vector.broadcast %54 : f32 to vector<2x1x85xf32>
    %421 = arith.mulf %352, %420 : vector<2x1x85xf32>
    %422 = arith.addf %419, %421 : vector<2x1x85xf32>
    %423 = vector.extract_strided_slice %366 {offsets = [0, 0, 0], sizes = [2, 1, 83], strides = [1, 1, 1]} : vector<2x1x85xf32> to vector<2x1x83xf32>
    %424 = tpu.concatenate %61, %423 in 2 : vector<2x1x2xf32>, vector<2x1x83xf32> -> vector<2x1x85xf32>
    %425 = arith.addf %394, %424 : vector<2x1x85xf32>
    %426 = vector.extract_strided_slice %380 {offsets = [0, 0, 0], sizes = [2, 1, 84], strides = [1, 1, 1]} : vector<2x1x85xf32> to vector<2x1x84xf32>
    %427 = tpu.concatenate %60, %426 in 2 : vector<2x1x1xf32>, vector<2x1x84xf32> -> vector<2x1x85xf32>
    %428 = arith.addf %425, %427 : vector<2x1x85xf32>
    %429 = vector.extract_strided_slice %408 {offsets = [0, 0, 1], sizes = [2, 1, 84], strides = [1, 1, 1]} : vector<2x1x85xf32> to vector<2x1x84xf32>
    %430 = tpu.concatenate %429, %60 in 2 : vector<2x1x84xf32>, vector<2x1x1xf32> -> vector<2x1x85xf32>
    %431 = arith.addf %428, %430 : vector<2x1x85xf32>
    %432 = vector.extract_strided_slice %422 {offsets = [0, 0, 2], sizes = [2, 1, 83], strides = [1, 1, 1]} : vector<2x1x85xf32> to vector<2x1x83xf32>
    %433 = tpu.concatenate %432, %61 in 2 : vector<2x1x83xf32>, vector<2x1x2xf32> -> vector<2x1x85xf32>
    %434 = arith.addf %431, %433 : vector<2x1x85xf32>
    %435 = vector.broadcast %55 : f32 to vector<2x1x85xf32>
    %436 = arith.addf %434, %435 : vector<2x1x85xf32>
    %cst_29 = arith.constant 0.000000e+00 : f32
    %437 = vector.broadcast %cst_29 : f32 to vector<2x1x85xf32>
    %438 = arith.maximumf %436, %437 : vector<2x1x85xf32>
    %439 = vector.shape_cast %438 : vector<2x1x85xf32> to vector<2x85xf32>
    %cst_30 = arith.constant dense<0.000000e+00> : vector<2x10xf32>
    %440 = tpu.matmul %439, %57, %cst_30 {dimension_numbers = #tpu.dot_dimension_numbers<[1], [0], [0], [1], [0, 0, 1, 1], [], []>} : vector<2x85xf32>, vector<85x10xf32>, vector<2x10xf32> -> vector<2x10xf32>
    %441 = vector.broadcast %58 : vector<1x10xf32> to vector<2x10xf32>
    %442 = arith.addf %440, %441 : vector<2x10xf32>
    %cst_31 = arith.constant 0.000000e+00 : f32
    %443 = vector.broadcast %cst_31 : f32 to vector<2x10xf32>
    %444 = arith.maximumf %442, %443 : vector<2x10xf32>
    %445 = vector.broadcast %59 : vector<1x10xf32> to vector<2x10xf32>
    %446 = arith.mulf %444, %445 : vector<2x10xf32>
    %cst_32 = arith.constant dense<0.000000e+00> : vector<2xf32>
    %447 = vector.multi_reduction <add>, %446, %cst_32 [1] : vector<2x10xf32> to vector<2xf32>
    %448 = vector.shape_cast %447 : vector<2xf32> to vector<2x1xf32>
    %449 = vector.broadcast %56 : f32 to vector<2x1xf32>
    %450 = arith.addf %448, %449 : vector<2x1xf32>
    %cst_33 = arith.constant 0.000000e+00 : f32
    %451 = vector.broadcast %cst_33 : f32 to vector<2x1xf32>
    %452 = arith.subf %451, %450 : vector<2x1xf32>
    %453 = math.exp %452 : vector<2x1xf32>
    %cst_34 = arith.constant 1.000000e+00 : f32
    %454 = vector.broadcast %cst_34 : f32 to vector<2x1xf32>
    %455 = arith.addf %454, %453 : vector<2x1xf32>
    %456 = tpu.reciprocal %455 : vector<2x1xf32> -> vector<2x1xf32>
    %c0_35 = arith.constant 0 : index
    %c0_36 = arith.constant 0 : index
    %457 = vector.load %arg3[%c0_35, %c0_36] : memref<2x1xf32, #tpu.memory_space<vmem>>, vector<2x1xf32>
    tpu.vector_store %arg3[%c0_35, %c0_36], %456 {strides = array<i32>} : memref<2x1xf32, #tpu.memory_space<vmem>>, vector<2x1xf32>,
    return
  }
}

</mosaic_0001>

<llo_original>
// kernel: model_forward.2
$region0: #{model_forward.2}
  #allocation0 [shape = 'u32[]', space=smem, size = 0x4, offset = 0x4, fixed_abs, tag = 'smem constant byte address 0x4 - core index']
  #allocation1 [shape = 'u32[144,128]{1,0:T(1,128)}', space=vmem, size = 0x12000, scoped, tag = 'internal scratch']
  %s0 = inlined_call_operand.vmem [shape: f32[57], index: 0, kind: input, shape index: {}]
  %s1 = inlined_call_operand.vmem [shape: f32[96,16], index: 1, kind: input, shape index: {}]
  %s2 = inlined_call_operand.vmem [shape: f32[2,85,3], index: 2, kind: input, shape index: {}]
  %s3 = inlined_call_operand.vmem [shape: f32[2,1], index: 3, kind: output, shape index: {}]
  %s4 = sld [smem:[#allocation0]]
  $region26: #{model_forward.2} parent=0
    _
  %s6 = ssub.s32 1, %s4
  %s7 = scalar_select 0, %s6, %s4
  $region1: #{model_forward.2} parent=0
    #allocation2 [shape = 'u8[512]{0}', space=smem, size = 0x200, scoped, tag = 'input window, operand 1, single buffered']
    #allocation3 [shape = 's32[1]{0}', space=sflag, size = 0x4, scoped, tag = 'scoped memory for model_forward.2']
    #allocation4 [shape = 'u8[4096]{0}', space=vmem, size = 0x1000, dematerialized = true, scoped, tag = 'FusionAdapter Buffer %fusion.1 = f32[2,3,85]{2,1,0:T(4,128)} fusion(%param_2.1), kind=kLoop, calls=%fused_computation.1.clone, metadata={op_name="jit(model_forward)/transpose" stack_frame_id=8}']
    %8 = vsyncpa [#allocation3], 0
    // Predicated region
    $region2: #{model_forward.2} parent=1 // pred_check
      _
    $region3: #{model_forward.2} parent=1 // pred_check_branch
      %10 = sbr.rel (0) target = $region5
    $region4: #{model_forward.2} parent=1 // pred_region
      _
    $region5: #{model_forward.2} parent=1 // pred_fallthru
      _
    // Predicated region
    $region6: #{model_forward.2} parent=1 // pred_check
      _
    $region7: #{model_forward.2} parent=1 // pred_check_branch
      %12 = sbr.rel (0) target = $region9
    $region8: #{model_forward.2} parent=1 // pred_region
      %s14 = ssub.s32 16, 16
      %15 = vsyncadd [#allocation3], %s14
      %s17 = sshll.u32 %s0, 4
      %s18 = int_to_ptr.vmem [resolvable:$true] %s17
      %20 = dma.vmem_to_smem %s18, 16, [#allocation2], [#allocation3]
    $region9: #{model_forward.2} parent=1 // pred_fallthru
      _
    // Predicated region
    $region10: #{model_forward.2} parent=1 // pred_check
      _
    $region11: #{model_forward.2} parent=1 // pred_check_branch
      %22 = sbr.rel (0) target = $region13
    $region12: #{model_forward.2} parent=1 // pred_region
      _
    $region13: #{model_forward.2} parent=1 // pred_fallthru
      _
    // Predicated region
    $region14: #{model_forward.2} parent=1 // pred_check
      _
    $region15: #{model_forward.2} parent=1 // pred_check_branch
      %24 = sbr.rel (0) target = $region17
    $region16: #{model_forward.2} parent=1 // pred_region
      %25 = dma.done [#allocation3], 16
    $region17: #{model_forward.2} parent=1 // pred_fallthru
      _
    %26 = sfence
    %v27 = vld [vmem:[%s2] sm:$0x7]
    %29 = vst [vmem:[#allocation4] sm:$0xf] %v27
    %s30 = scalar_lea.vmem %s2, 4
    %v31 = vld [vmem:[%s30] sm:$0x7]
    %s32 = scalar_lea.vmem [#allocation4], 4
    %34 = vst [vmem:[%s32] sm:$0xf] %v31
    %s35 = sld [smem:[#allocation2]]
    %s36 = sld [smem:[#allocation2 + $0x1]]
    %s37 = sld [smem:[#allocation2 + $0x2]]
    %s38 = sld [smem:[#allocation2 + $0x3]]
    %s39 = sld [smem:[#allocation2 + $0x4]]
    %s40 = sld [smem:[#allocation2 + $0x5]]
    %s41 = sld [smem:[#allocation2 + $0x6]]
    %s42 = sld [smem:[#allocation2 + $0x7]]
    %s43 = sld [smem:[#allocation2 + $0x8]]
    %s44 = sld [smem:[#allocation2 + $0x9]]
    %s45 = sld [smem:[#allocation2 + $0xa]]
    %s46 = sld [smem:[#allocation2 + $0xb]]
    %s47 = sld [smem:[#allocation2 + $0xc]]
    %s48 = sld [smem:[#allocation2 + $0xd]]
    %s49 = sld [smem:[#allocation2 + $0xe]]
    %s50 = sld [smem:[#allocation2 + $0xf]]
    %s51 = sld [smem:[#allocation2 + $0x10]]
    %s52 = sld [smem:[#allocation2 + $0x11]]
    %s53 = sld [smem:[#allocation2 + $0x12]]
    %s54 = sld [smem:[#allocation2 + $0x13]]
    %s55 = sld [smem:[#allocation2 + $0x14]]
    %s56 = sld [smem:[#allocation2 + $0x15]]
    %s57 = sld [smem:[#allocation2 + $0x16]]
    %s58 = sld [smem:[#allocation2 + $0x17]]
    %s59 = sld [smem:[#allocation2 + $0x18]]
    %s60 = sld [smem:[#allocation2 + $0x19]]
    %s61 = sld [smem:[#allocation2 + $0x1a]]
    %s62 = sld [smem:[#allocation2 + $0x1b]]
    %s63 = sld [smem:[#allocation2 + $0x1c]]
    %s64 = sld [smem:[#allocation2 + $0x1d]]
    %s65 = sld [smem:[#allocation2 + $0x1e]]
    %s66 = sld [smem:[#allocation2 + $0x1f]]
    %s67 = sld [smem:[#allocation2 + $0x20]]
    %s68 = sld [smem:[#allocation2 + $0x21]]
    %s69 = sld [smem:[#allocation2 + $0x22]]
    %s70 = sld [smem:[#allocation2 + $0x23]]
    %s71 = sld [smem:[#allocation2 + $0x24]]
    %s72 = sld [smem:[#allocation2 + $0x25]]
    %s73 = sld [smem:[#allocation2 + $0x26]]
    %s74 = sld [smem:[#allocation2 + $0x27]]
    %s75 = sld [smem:[#allocation2 + $0x28]]
    %s76 = sld [smem:[#allocation2 + $0x29]]
    %s77 = sld [smem:[#allocation2 + $0x2a]]
    %s78 = sld [smem:[#allocation2 + $0x2b]]
    %s79 = sld [smem:[#allocation2 + $0x2c]]
    %s80 = sld [smem:[#allocation2 + $0x2d]]
    %s81 = sld [smem:[#allocation2 + $0x2e]]
    %s82 = sld [smem:[#allocation2 + $0x2f]]
    %s83 = sld [smem:[#allocation2 + $0x30]]
    %s84 = sld [smem:[#allocation2 + $0x31]]
    %s85 = sld [smem:[#allocation2 + $0x32]]
    %s86 = sld [smem:[#allocation2 + $0x33]]
    %s87 = sld [smem:[#allocation2 + $0x34]]
    %s88 = sld [smem:[#allocation2 + $0x35]]
    %s89 = sld [smem:[#allocation2 + $0x36]]
    %s90 = sld [smem:[#allocation2 + $0x37]]
    %s91 = sld [smem:[#allocation2 + $0x38]]
    %v92 = vld [vmem:[%s1] sm:$0xff]
    %v93 = vld [vmem:[%s1 + $0x8] sm:$0xff]
    %v94 = vld [vmem:[%s1 + $0x10] sm:$0xff]
    %v95 = vld [vmem:[%s1 + $0x18] sm:$0xff]
    %v96 = vld [vmem:[%s1 + $0x20] sm:$0xff]
    %v97 = vld [vmem:[%s1 + $0x28] sm:$0xff]
    %v98 = vld [vmem:[%s1 + $0x30] sm:$0xff]
    %v99 = vld [vmem:[%s1 + $0x38] sm:$0xff]
    %v100 = vld [vmem:[%s1 + $0x40] sm:$0xff]
    %v101 = vld [vmem:[%s1 + $0x48] sm:$0xff]
    %v102 = vld [vmem:[%s1 + $0x50] sm:$0x1f]
    %v103 = vld [vmem:[%s1 + $0x58] sm:$0x1]
    %v104 = vld [vmem:[%s1 + $0x59] sm:$0x1]
    %v105 = vld [vmem:[#allocation4] sm:$0x1]
    %v106 = vld [vmem:[#allocation4 + $0x4] sm:$0x1]
    %v107 = vld [vmem:[#allocation4 + $0x1] sm:$0x1]
    %v108 = vld [vmem:[#allocation4 + $0x5] sm:$0x1]
    %v109 = vld [vmem:[#allocation4 + $0x2] sm:$0x1]
    %v110 = vld [vmem:[#allocation4 + $0x6] sm:$0x1]
    %113 = vrot.lane.b32.xlu0 %v105, 127
    %v114 = vpop.permute.xlu0 %113
    %115 = vrot.lane.b32.xlu0 %v106, 127
    %v116 = vpop.permute.xlu0 %115
    %vm119 = vcmask 687104
    %v120 = vsel %vm119, %v114, 0.0
    %v121 = vsel %vm119, %v116, 0.0
    %124 = vrot.lane.b32.xlu0 %v107, 127
    %v125 = vpop.permute.xlu0 %124
    %126 = vrot.lane.b32.xlu0 %v108, 127
    %v127 = vpop.permute.xlu0 %126
    %v130 = vsel %vm119, %v125, 0.0
    %v131 = vsel %vm119, %v127, 0.0
    %134 = vrot.lane.b32.xlu0 %v109, 1
    %v135 = vpop.permute.xlu0 %134
    %136 = vrot.lane.b32.xlu0 %v110, 1
    %v137 = vpop.permute.xlu0 %136
    %vm140 = vcmask 7168
    %v141 = vsel %vm140, 0.0, %v135
    %v142 = vsel %vm140, 0.0, %v137
    %143 = vrot.lane.b32.xlu0 %v107, 1
    %v144 = vpop.permute.xlu0 %143
    %145 = vrot.lane.b32.xlu0 %v108, 1
    %v146 = vpop.permute.xlu0 %145
    %v149 = vsel %vm140, 0.0, %v144
    %v150 = vsel %vm140, 0.0, %v146
    %v151 = vstv %s35
    %v152 = vmul.f32 %v149, %v151
    %v153 = vmul.f32 %v150, %v151
    %v154 = vstv %s36
    %v155 = vmul.f32 %v141, %v154
    %v156 = vmul.f32 %v142, %v154
    %v157 = vadd.f32 %v152, %v155
    %v158 = vadd.f32 %v153, %v156
    %v159 = vstv %s37
    %v160 = vmul.f32 %v105, %v159
    %v161 = vmul.f32 %v106, %v159
    %v162 = vadd.f32 %v157, %v160
    %v163 = vadd.f32 %v158, %v161
    %v164 = vstv %s38
    %v165 = vmul.f32 %v107, %v164
    %v166 = vmul.f32 %v108, %v164
    %v167 = vadd.f32 %v162, %v165
    %v168 = vadd.f32 %v163, %v166
    %v169 = vstv %s39
    %v170 = vmul.f32 %v109, %v169
    %v171 = vmul.f32 %v110, %v169
    %v172 = vadd.f32 %v167, %v170
    %v173 = vadd.f32 %v168, %v171
    %v174 = vstv %s60
    %v175 = vadd.f32 %v172, %v174
    %v176 = vadd.f32 %v173, %v174
    %v177 = vmax.f32 %v175, 0.0
    %v178 = vmax.f32 %v176, 0.0
    %v179 = vmul.f32 %v141, %v151
    %v180 = vmul.f32 %v142, %v151
    %v181 = vmul.f32 %v105, %v154
    %v182 = vmul.f32 %v106, %v154
    %v183 = vadd.f32 %v179, %v181
    %v184 = vadd.f32 %v180, %v182
    %v185 = vmul.f32 %v107, %v159
    %v186 = vmul.f32 %v108, %v159
    %v187 = vadd.f32 %v183, %v185
    %v188 = vadd.f32 %v184, %v186
    %v189 = vmul.f32 %v109, %v164
    %v190 = vmul.f32 %v110, %v164
    %v191 = vadd.f32 %v187, %v189
    %v192 = vadd.f32 %v188, %v190
    %v193 = vmul.f32 %v120, %v169
    %v194 = vmul.f32 %v121, %v169
    %v195 = vadd.f32 %v191, %v193
    %v196 = vadd.f32 %v192, %v194
    %v197 = vadd.f32 %v195, %v174
    %v198 = vadd.f32 %v196, %v174
    %v199 = vmax.f32 %v197, 0.0
    %v200 = vmax.f32 %v198, 0.0
    %v201 = vmax.f32 %v177, %v199
    %v202 = vmax.f32 %v178, %v200
    %v203 = vmul.f32 %v105, %v151
    %v204 = vmul.f32 %v106, %v151
    %v205 = vmul.f32 %v107, %v154
    %v206 = vmul.f32 %v108, %v154
    %v207 = vadd.f32 %v203, %v205
    %v208 = vadd.f32 %v204, %v206
    %v209 = vmul.f32 %v109, %v159
    %v210 = vmul.f32 %v110, %v159
    %v211 = vadd.f32 %v207, %v209
    %v212 = vadd.f32 %v208, %v210
    %v213 = vmul.f32 %v120, %v164
    %v214 = vmul.f32 %v121, %v164
    %v215 = vadd.f32 %v211, %v213
    %v216 = vadd.f32 %v212, %v214
    %v217 = vmul.f32 %v130, %v169
    %v218 = vmul.f32 %v131, %v169
    %v219 = vadd.f32 %v215, %v217
    %v220 = vadd.f32 %v216, %v218
    %v221 = vadd.f32 %v219, %v174
    %v222 = vadd.f32 %v220, %v174
    %v223 = vmax.f32 %v221, 0.0
    %v224 = vmax.f32 %v222, 0.0
    %v225 = vmax.f32 %v201, %v223
    %v226 = vmax.f32 %v202, %v224
    %v227 = vstv %s40
    %v228 = vmul.f32 %v149, %v227
    %v229 = vmul.f32 %v150, %v227
    %v230 = vstv %s41
    %v231 = vmul.f32 %v141, %v230
    %v232 = vmul.f32 %v142, %v230
    %v233 = vadd.f32 %v228, %v231
    %v234 = vadd.f32 %v229, %v232
    %v235 = vstv %s42
    %v236 = vmul.f32 %v105, %v235
    %v237 = vmul.f32 %v106, %v235
    %v238 = vadd.f32 %v233, %v236
    %v239 = vadd.f32 %v234, %v237
    %v240 = vstv %s43
    %v241 = vmul.f32 %v107, %v240
    %v242 = vmul.f32 %v108, %v240
    %v243 = vadd.f32 %v238, %v241
    %v244 = vadd.f32 %v239, %v242
    %v245 = vstv %s44
    %v246 = vmul.f32 %v109, %v245
    %v247 = vmul.f32 %v110, %v245
    %v248 = vadd.f32 %v243, %v246
    %v249 = vadd.f32 %v244, %v247
    %v250 = vstv %s61
    %v251 = vadd.f32 %v248, %v250
    %v252 = vadd.f32 %v249, %v250
    %v253 = vmax.f32 %v251, 0.0
    %v254 = vmax.f32 %v252, 0.0
    %v255 = vmul.f32 %v141, %v227
    %v256 = vmul.f32 %v142, %v227
    %v257 = vmul.f32 %v105, %v230
    %v258 = vmul.f32 %v106, %v230
    %v259 = vadd.f32 %v255, %v257
    %v260 = vadd.f32 %v256, %v258
    %v261 = vmul.f32 %v107, %v235
    %v262 = vmul.f32 %v108, %v235
    %v263 = vadd.f32 %v259, %v261
    %v264 = vadd.f32 %v260, %v262
    %v265 = vmul.f32 %v109, %v240
    %v266 = vmul.f32 %v110, %v240
    %v267 = vadd.f32 %v263, %v265
    %v268 = vadd.f32 %v264, %v266
    %v269 = vmul.f32 %v120, %v245
    %v270 = vmul.f32 %v121, %v245
    %v271 = vadd.f32 %v267, %v269
    %v272 = vadd.f32 %v268, %v270
    %v273 = vadd.f32 %v271, %v250
    %v274 = vadd.f32 %v272, %v250
    %v275 = vmax.f32 %v273, 0.0
    %v276 = vmax.f32 %v274, 0.0
    %v277 = vmax.f32 %v253, %v275
    %v278 = vmax.f32 %v254, %v276
    %v279 = vmul.f32 %v105, %v227
    %v280 = vmul.f32 %v106, %v227
    %v281 = vmul.f32 %v107, %v230
    %v282 = vmul.f32 %v108, %v230
    %v283 = vadd.f32 %v279, %v281
    %v284 = vadd.f32 %v280, %v282
    %v285 = vmul.f32 %v109, %v235
    %v286 = vmul.f32 %v110, %v235
    %v287 = vadd.f32 %v283, %v285
    %v288 = vadd.f32 %v284, %v286
    %v289 = vmul.f32 %v120, %v240
    %v290 = vmul.f32 %v121, %v240
    %v291 = vadd.f32 %v287, %v289
    %v292 = vadd.f32 %v288, %v290
    %v293 = vmul.f32 %v130, %v245
    %v294 = vmul.f32 %v131, %v245
    %v295 = vadd.f32 %v291, %v293
    %v296 = vadd.f32 %v292, %v294
    %v297 = vadd.f32 %v295, %v250
    %v298 = vadd.f32 %v296, %v250
    %v299 = vmax.f32 %v297, 0.0
    %v300 = vmax.f32 %v298, 0.0
    %v301 = vmax.f32 %v277, %v299
    %v302 = vmax.f32 %v278, %v300
    %v303 = vstv %s45
    %v304 = vmul.f32 %v149, %v303
    %v305 = vmul.f32 %v150, %v303
    %v306 = vstv %s46
    %v307 = vmul.f32 %v141, %v306
    %v308 = vmul.f32 %v142, %v306
    %v309 = vadd.f32 %v304, %v307
    %v310 = vadd.f32 %v305, %v308
    %v311 = vstv %s47
    %v312 = vmul.f32 %v105, %v311
    %v313 = vmul.f32 %v106, %v311
    %v314 = vadd.f32 %v309, %v312
    %v315 = vadd.f32 %v310, %v313
    %v316 = vstv %s48
    %v317 = vmul.f32 %v107, %v316
    %v318 = vmul.f32 %v108, %v316
    %v319 = vadd.f32 %v314, %v317
    %v320 = vadd.f32 %v315, %v318
    %v321 = vstv %s49
    %v322 = vmul.f32 %v109, %v321
    %v323 = vmul.f32 %v110, %v321
    %v324 = vadd.f32 %v319, %v322
    %v325 = vadd.f32 %v320, %v323
    %v326 = vstv %s62
    %v327 = vadd.f32 %v324, %v326
    %v328 = vadd.f32 %v325, %v326
    %v329 = vmax.f32 %v327, 0.0
    %v330 = vmax.f32 %v328, 0.0
    %v331 = vmul.f32 %v141, %v303
    %v332 = vmul.f32 %v142, %v303
    %v333 = vmul.f32 %v105, %v306
    %v334 = vmul.f32 %v106, %v306
    %v335 = vadd.f32 %v331, %v333
    %v336 = vadd.f32 %v332, %v334
    %v337 = vmul.f32 %v107, %v311
    %v338 = vmul.f32 %v108, %v311
    %v339 = vadd.f32 %v335, %v337
    %v340 = vadd.f32 %v336, %v338
    %v341 = vmul.f32 %v109, %v316
    %v342 = vmul.f32 %v110, %v316
    %v343 = vadd.f32 %v339, %v341
    %v344 = vadd.f32 %v340, %v342
    %v345 = vmul.f32 %v120, %v321
    %v346 = vmul.f32 %v121, %v321
    %v347 = vadd.f32 %v343, %v345
    %v348 = vadd.f32 %v344, %v346
    %v349 = vadd.f32 %v347, %v326
    %v350 = vadd.f32 %v348, %v326
    %v351 = vmax.f32 %v349, 0.0
    %v352 = vmax.f32 %v350, 0.0
    %v353 = vmax.f32 %v329, %v351
    %v354 = vmax.f32 %v330, %v352
    %v355 = vmul.f32 %v105, %v303
    %v356 = vmul.f32 %v106, %v303
    %v357 = vmul.f32 %v107, %v306
    %v358 = vmul.f32 %v108, %v306
    %v359 = vadd.f32 %v355, %v357
    %v360 = vadd.f32 %v356, %v358
    %v361 = vmul.f32 %v109, %v311
    %v362 = vmul.f32 %v110, %v311
    %v363 = vadd.f32 %v359, %v361
    %v364 = vadd.f32 %v360, %v362
    %v365 = vmul.f32 %v120, %v316
    %v366 = vmul.f32 %v121, %v316
    %v367 = vadd.f32 %v363, %v365
    %v368 = vadd.f32 %v364, %v366
    %v369 = vmul.f32 %v130, %v321
    %v370 = vmul.f32 %v131, %v321
    %v371 = vadd.f32 %v367, %v369
    %v372 = vadd.f32 %v368, %v370
    %v373 = vadd.f32 %v371, %v326
    %v374 = vadd.f32 %v372, %v326
    %v375 = vmax.f32 %v373, 0.0
    %v376 = vmax.f32 %v374, 0.0
    %v377 = vmax.f32 %v353, %v375
    %v378 = vmax.f32 %v354, %v376
    %v379 = vstv %s50
    %v380 = vmul.f32 %v149, %v379
    %v381 = vmul.f32 %v150, %v379
    %v382 = vstv %s51
    %v383 = vmul.f32 %v141, %v382
    %v384 = vmul.f32 %v142, %v382
    %v385 = vadd.f32 %v380, %v383
    %v386 = vadd.f32 %v381, %v384
    %v387 = vstv %s52
    %v388 = vmul.f32 %v105, %v387
    %v389 = vmul.f32 %v106, %v387
    %v390 = vadd.f32 %v385, %v388
    %v391 = vadd.f32 %v386, %v389
    %v392 = vstv %s53
    %v393 = vmul.f32 %v107, %v392
    %v394 = vmul.f32 %v108, %v392
    %v395 = vadd.f32 %v390, %v393
    %v396 = vadd.f32 %v391, %v394
    %v397 = vstv %s54
    %v398 = vmul.f32 %v109, %v397
    %v399 = vmul.f32 %v110, %v397
    %v400 = vadd.f32 %v395, %v398
    %v401 = vadd.f32 %v396, %v399
    %v402 = vstv %s63
    %v403 = vadd.f32 %v400, %v402
    %v404 = vadd.f32 %v401, %v402
    %v405 = vmax.f32 %v403, 0.0
    %v406 = vmax.f32 %v404, 0.0
    %v407 = vmul.f32 %v141, %v379
    %v408 = vmul.f32 %v142, %v379
    %v409 = vmul.f32 %v105, %v382
    %v410 = vmul.f32 %v106, %v382
    %v411 = vadd.f32 %v407, %v409
    %v412 = vadd.f32 %v408, %v410
    %v413 = vmul.f32 %v107, %v387
    %v414 = vmul.f32 %v108, %v387
    %v415 = vadd.f32 %v411, %v413
    %v416 = vadd.f32 %v412, %v414
    %v417 = vmul.f32 %v109, %v392
    %v418 = vmul.f32 %v110, %v392
    %v419 = vadd.f32 %v415, %v417
    %v420 = vadd.f32 %v416, %v418
    %v421 = vmul.f32 %v120, %v397
    %v422 = vmul.f32 %v121, %v397
    %v423 = vadd.f32 %v419, %v421
    %v424 = vadd.f32 %v420, %v422
    %v425 = vadd.f32 %v423, %v402
    %v426 = vadd.f32 %v424, %v402
    %v427 = vmax.f32 %v425, 0.0
    %v428 = vmax.f32 %v426, 0.0
    %v429 = vmax.f32 %v405, %v427
    %v430 = vmax.f32 %v406, %v428
    %v431 = vmul.f32 %v105, %v379
    %v432 = vmul.f32 %v106, %v379
    %v433 = vmul.f32 %v107, %v382
    %v434 = vmul.f32 %v108, %v382
    %v435 = vadd.f32 %v431, %v433
    %v436 = vadd.f32 %v432, %v434
    %v437 = vmul.f32 %v109, %v387
    %v438 = vmul.f32 %v110, %v387
    %v439 = vadd.f32 %v435, %v437
    %v440 = vadd.f32 %v436, %v438
    %v441 = vmul.f32 %v120, %v392
    %v442 = vmul.f32 %v121, %v392
    %v443 = vadd.f32 %v439, %v441
    %v444 = vadd.f32 %v440, %v442
    %v445 = vmul.f32 %v130, %v397
    %v446 = vmul.f32 %v131, %v397
    %v447 = vadd.f32 %v443, %v445
    %v448 = vadd.f32 %v444, %v446
    %v449 = vadd.f32 %v447, %v402
    %v450 = vadd.f32 %v448, %v402
    %v451 = vmax.f32 %v449, 0.0
    %v452 = vmax.f32 %v450, 0.0
    %v453 = vmax.f32 %v429, %v451
    %v454 = vmax.f32 %v430, %v452
    %v455 = vstv %s55
    %v456 = vmul.f32 %v149, %v455
    %v457 = vmul.f32 %v150, %v455
    %v458 = vstv %s56
    %v459 = vmul.f32 %v141, %v458
    %v460 = vmul.f32 %v142, %v458
    %v461 = vadd.f32 %v456, %v459
    %v462 = vadd.f32 %v457, %v460
    %v463 = vstv %s57
    %v464 = vmul.f32 %v105, %v463
    %v465 = vmul.f32 %v106, %v463
    %v466 = vadd.f32 %v461, %v464
    %v467 = vadd.f32 %v462, %v465
    %v468 = vstv %s58
    %v469 = vmul.f32 %v107, %v468
    %v470 = vmul.f32 %v108, %v468
    %v471 = vadd.f32 %v466, %v469
    %v472 = vadd.f32 %v467, %v470
    %v473 = vstv %s59
    %v474 = vmul.f32 %v109, %v473
    %v475 = vmul.f32 %v110, %v473
    %v476 = vadd.f32 %v471, %v474
    %v477 = vadd.f32 %v472, %v475
    %v478 = vstv %s64
    %v479 = vadd.f32 %v476, %v478
    %v480 = vadd.f32 %v477, %v478
    %v481 = vmax.f32 %v479, 0.0
    %v482 = vmax.f32 %v480, 0.0
    %v483 = vmul.f32 %v141, %v455
    %v484 = vmul.f32 %v142, %v455
    %v485 = vmul.f32 %v105, %v458
    %v486 = vmul.f32 %v106, %v458
    %v487 = vadd.f32 %v483, %v485
    %v488 = vadd.f32 %v484, %v486
    %v489 = vmul.f32 %v107, %v463
    %v490 = vmul.f32 %v108, %v463
    %v491 = vadd.f32 %v487, %v489
    %v492 = vadd.f32 %v488, %v490
    %v493 = vmul.f32 %v109, %v468
    %v494 = vmul.f32 %v110, %v468
    %v495 = vadd.f32 %v491, %v493
    %v496 = vadd.f32 %v492, %v494
    %v497 = vmul.f32 %v120, %v473
    %v498 = vmul.f32 %v121, %v473
    %v499 = vadd.f32 %v495, %v497
    %v500 = vadd.f32 %v496, %v498
    %v501 = vadd.f32 %v499, %v478
    %v502 = vadd.f32 %v500, %v478
    %v503 = vmax.f32 %v501, 0.0
    %v504 = vmax.f32 %v502, 0.0
    %v505 = vmax.f32 %v481, %v503
    %v506 = vmax.f32 %v482, %v504
    %v507 = vmul.f32 %v105, %v455
    %v508 = vmul.f32 %v106, %v455
    %v509 = vmul.f32 %v107, %v458
    %v510 = vmul.f32 %v108, %v458
    %v511 = vadd.f32 %v507, %v509
    %v512 = vadd.f32 %v508, %v510
    %v513 = vmul.f32 %v109, %v463
    %v514 = vmul.f32 %v110, %v463
    %v515 = vadd.f32 %v511, %v513
    %v516 = vadd.f32 %v512, %v514
    %v517 = vmul.f32 %v120, %v468
    %v518 = vmul.f32 %v121, %v468
    %v519 = vadd.f32 %v515, %v517
    %v520 = vadd.f32 %v516, %v518
    %v521 = vmul.f32 %v130, %v473
    %v522 = vmul.f32 %v131, %v473
    %v523 = vadd.f32 %v519, %v521
    %v524 = vadd.f32 %v520, %v522
    %v525 = vadd.f32 %v523, %v478
    %v526 = vadd.f32 %v524, %v478
    %v527 = vmax.f32 %v525, 0.0
    %v528 = vmax.f32 %v526, 0.0
    %v529 = vmax.f32 %v505, %v527
    %v530 = vmax.f32 %v506, %v528
    %v531 = vstv %s65
    %v532 = vmul.f32 %v225, %v531
    %v533 = vmul.f32 %v226, %v531
    %v534 = vstv %s70
    %v535 = vmul.f32 %v301, %v534
    %v536 = vmul.f32 %v302, %v534
    %v537 = vadd.f32 %v532, %v535
    %v538 = vadd.f32 %v533, %v536
    %v539 = vstv %s75
    %v540 = vmul.f32 %v377, %v539
    %v541 = vmul.f32 %v378, %v539
    %v542 = vadd.f32 %v537, %v540
    %v543 = vadd.f32 %v538, %v541
    %v544 = vstv %s80
    %v545 = vmul.f32 %v453, %v544
    %v546 = vmul.f32 %v454, %v544
    %v547 = vadd.f32 %v542, %v545
    %v548 = vadd.f32 %v543, %v546
    %v549 = vstv %s85
    %v550 = vmul.f32 %v529, %v549
    %v551 = vmul.f32 %v530, %v549
    %v552 = vadd.f32 %v547, %v550
    %v553 = vadd.f32 %v548, %v551
    %v554 = vstv %s66
    %v555 = vmul.f32 %v225, %v554
    %v556 = vmul.f32 %v226, %v554
    %v557 = vstv %s71
    %v558 = vmul.f32 %v301, %v557
    %v559 = vmul.f32 %v302, %v557
    %v560 = vadd.f32 %v555, %v558
    %v561 = vadd.f32 %v556, %v559
    %v562 = vstv %s76
    %v563 = vmul.f32 %v377, %v562
    %v564 = vmul.f32 %v378, %v562
    %v565 = vadd.f32 %v560, %v563
    %v566 = vadd.f32 %v561, %v564
    %v567 = vstv %s81
    %v568 = vmul.f32 %v453, %v567
    %v569 = vmul.f32 %v454, %v567
    %v570 = vadd.f32 %v565, %v568
    %v571 = vadd.f32 %v566, %v569
    %v572 = vstv %s86
    %v573 = vmul.f32 %v529, %v572
    %v574 = vmul.f32 %v530, %v572
    %v575 = vadd.f32 %v570, %v573
    %v576 = vadd.f32 %v571, %v574
    %v577 = vstv %s67
    %v578 = vmul.f32 %v225, %v577
    %v579 = vmul.f32 %v226, %v577
    %v580 = vstv %s72
    %v581 = vmul.f32 %v301, %v580
    %v582 = vmul.f32 %v302, %v580
    %v583 = vadd.f32 %v578, %v581
    %v584 = vadd.f32 %v579, %v582
    %v585 = vstv %s77
    %v586 = vmul.f32 %v377, %v585
    %v587 = vmul.f32 %v378, %v585
    %v588 = vadd.f32 %v583, %v586
    %v589 = vadd.f32 %v584, %v587
    %v590 = vstv %s82
    %v591 = vmul.f32 %v453, %v590
    %v592 = vmul.f32 %v454, %v590
    %v593 = vadd.f32 %v588, %v591
    %v594 = vadd.f32 %v589, %v592
    %v595 = vstv %s87
    %v596 = vmul.f32 %v529, %v595
    %v597 = vmul.f32 %v530, %v595
    %v598 = vadd.f32 %v593, %v596
    %v599 = vadd.f32 %v594, %v597
    %v600 = vstv %s68
    %v601 = vmul.f32 %v225, %v600
    %v602 = vmul.f32 %v226, %v600
    %v603 = vstv %s73
    %v604 = vmul.f32 %v301, %v603
    %v605 = vmul.f32 %v302, %v603
    %v606 = vadd.f32 %v601, %v604
    %v607 = vadd.f32 %v602, %v605
    %v608 = vstv %s78
    %v609 = vmul.f32 %v377, %v608
    %v610 = vmul.f32 %v378, %v608
    %v611 = vadd.f32 %v606, %v609
    %v612 = vadd.f32 %v607, %v610
    %v613 = vstv %s83
    %v614 = vmul.f32 %v453, %v613
    %v615 = vmul.f32 %v454, %v613
    %v616 = vadd.f32 %v611, %v614
    %v617 = vadd.f32 %v612, %v615
    %v618 = vstv %s88
    %v619 = vmul.f32 %v529, %v618
    %v620 = vmul.f32 %v530, %v618
    %v621 = vadd.f32 %v616, %v619
    %v622 = vadd.f32 %v617, %v620
    %v623 = vstv %s69
    %v624 = vmul.f32 %v225, %v623
    %v625 = vmul.f32 %v226, %v623
    %v626 = vstv %s74
    %v627 = vmul.f32 %v301, %v626
    %v628 = vmul.f32 %v302, %v626
    %v629 = vadd.f32 %v624, %v627
    %v630 = vadd.f32 %v625, %v628
    %v631 = vstv %s79
    %v632 = vmul.f32 %v377, %v631
    %v633 = vmul.f32 %v378, %v631
    %v634 = vadd.f32 %v629, %v632
    %v635 = vadd.f32 %v630, %v633
    %v636 = vstv %s84
    %v637 = vmul.f32 %v453, %v636
    %v638 = vmul.f32 %v454, %v636
    %v639 = vadd.f32 %v634, %v637
    %v640 = vadd.f32 %v635, %v638
    %v641 = vstv %s89
    %v642 = vmul.f32 %v529, %v641
    %v643 = vmul.f32 %v530, %v641
    %v644 = vadd.f32 %v639, %v642
    %v645 = vadd.f32 %v640, %v643
    %648 = vrot.lane.b32.xlu0 %v552, 2
    %v649 = vpop.permute.xlu0 %648
    %650 = vrot.lane.b32.xlu0 %v553, 2
    %v651 = vpop.permute.xlu0 %650
    %vm654 = vcmask 15360
    %v655 = vsel %vm654, 0.0, %v649
    %v656 = vsel %vm654, 0.0, %v651
    %v657 = vadd.f32 %v598, %v655
    %v658 = vadd.f32 %v599, %v656
    %661 = vrot.lane.b32.xlu0 %v575, 1
    %v662 = vpop.permute.xlu0 %661
    %663 = vrot.lane.b32.xlu0 %v576, 1
    %v664 = vpop.permute.xlu0 %663
    %v667 = vsel %vm140, 0.0, %v662
    %v668 = vsel %vm140, 0.0, %v664
    %v669 = vadd.f32 %v657, %v667
    %v670 = vadd.f32 %v658, %v668
    %673 = vrot.lane.b32.xlu0 %v621, 127
    %v674 = vpop.permute.xlu0 %673
    %675 = vrot.lane.b32.xlu0 %v622, 127
    %v676 = vpop.permute.xlu0 %675
    %v679 = vsel %vm119, %v674, 0.0
    %v680 = vsel %vm119, %v676, 0.0
    %v681 = vadd.f32 %v669, %v679
    %v682 = vadd.f32 %v670, %v680
    %685 = vrot.lane.b32.xlu0 %v644, 126
    %v686 = vpop.permute.xlu0 %685
    %687 = vrot.lane.b32.xlu0 %v645, 126
    %v688 = vpop.permute.xlu0 %687
    %vm691 = vcmask 678912
    %v692 = vsel %vm691, %v686, 0.0
    %v693 = vsel %vm691, %v688, 0.0
    %v694 = vadd.f32 %v681, %v692
    %v695 = vadd.f32 %v682, %v693
    %v696 = vstv %s90
    %v697 = vadd.f32 %v694, %v696
    %v698 = vadd.f32 %v695, %v696
    %v699 = vmax.f32 %v697, 0.0
    %v700 = vmax.f32 %v698, 0.0
    %v701 = vlaneseq
    %v702 = vshrl.u32 %v701, 7
    %v703 = vsub.s32 0, %v702
    %v704 = vrot.slane %v103, %v703
    %v707 = vrot.slane %v700, 7
    %vm708 = vcmask 1041409
    %v709 = vsel %vm708, %v707, %v699
    %vm710 = vcmask 695296
    %v711 = vsel %vm710, %v709, 0
    %vm713 = vcmask 1044480
    %v715 = vsel %vm713, %v102, 0
    %717 = vmatprep.subr.mxu0 0.0
    %718 = vmatpush1.msra.mxu0 %v92
    %719 = vmatprep.subr.mxu0 0.0
    %720 = vmatpush1.msra.mxu0 %v93
    %721 = vmatprep.subr.mxu0 0.0
    %722 = vmatpush1.msra.mxu0 %v94
    %723 = vmatprep.subr.mxu0 0.0
    %724 = vmatpush1.msra.mxu0 %v95
    %725 = vmatprep.subr.mxu0 0.0
    %726 = vmatpush1.msra.mxu0 %v96
    %727 = vmatprep.subr.mxu0 0.0
    %728 = vmatpush1.msra.mxu0 %v97
    %729 = vmatprep.subr.mxu0 0.0
    %730 = vmatpush1.msra.mxu0 %v98
    %731 = vmatprep.subr.mxu0 0.0
    %732 = vmatpush1.msra.mxu0 %v99
    %733 = vmatprep.subr.mxu0 0.0
    %734 = vmatpush1.msra.mxu0 %v100
    %735 = vmatprep.subr.mxu0 0.0
    %736 = vmatpush1.msra.mxu0 %v101
    %737 = vmatprep.subr.mxu0 0.0
    %738 = vmatpush1.msra.mxu0 %v715
    %739 = vmatprep.subr.mxu0 0.0
    %740 = vmatpush1.msra.mxu0 0.0
    %741 = vmatprep.subr.mxu0 0.0
    %742 = vmatpush1.msra.mxu0 0.0
    %743 = vmatprep.subr.mxu0 0.0
    %744 = vmatpush1.msra.mxu0 0.0
    %745 = vmatprep.subr.mxu0 0.0
    %746 = vmatpush1.msra.mxu0 0.0
    %747 = vmatprep.subr.mxu0 0.0
    %748 = vmatpush1.msra.mxu0 0.0
    %749 = vmatprep.subr.mxu0 0.0
    %750 = vmatpush1.msra.mxu0 0.0
    %751 = vmatprep.subr.mxu0 0.0
    %752 = vmatpush1.msra.mxu0 0.0
    %753 = vmatprep.subr.mxu0 0.0
    %754 = vmatpush1.msra.mxu0 0.0
    %755 = vmatprep.subr.mxu0 0.0
    %756 = vmatpush1.msra.mxu0 0.0
    %757 = vmatprep.subr.mxu0 0.0
    %758 = vmatpush1.msra.mxu0 0.0
    %759 = vmatprep.subr.mxu0 0.0
    %760 = vmatpush1.msra.mxu0 0.0
    %761 = vmatprep.subr.mxu0 0.0
    %762 = vmatpush1.msra.mxu0 0.0
    %763 = vmatprep.subr.mxu0 0.0
    %764 = vmatpush1.msra.mxu0 0.0
    %765 = vmatprep.subr.mxu0 0.0
    %766 = vmatpush1.msra.mxu0 0.0
    %767 = vmatprep.subr.mxu0 0.0
    %768 = vmatpush1.msra.mxu0 0.0
    %769 = vmatprep.subr.mxu0 0.0
    %770 = vmatpush1.msra.mxu0 0.0
    %771 = vmatprep.subr.mxu0 0.0
    %772 = vmatpush1.msra.mxu0 0.0
    %773 = vmatprep.subr.mxu0 0.0
    %774 = vmatpush1.msra.mxu0 0.0
    %775 = vmatprep.subr.mxu0 0.0
    %776 = vmatpush1.msra.mxu0 0.0
    %777 = vmatprep.subr.mxu0 0.0
    %778 = vmatpush1.msra.mxu0 0.0
    %779 = vmatprep.subr.mxu0 0.0
    %780 = vmatpush1.msra.mxu0 0.0
    %781 = vmatprep.mubr.f32.mxu0 0.0
    %782 = vmatmul.mubr.f32.gmra.mrb[0].mxu0 %v711
    %v783 = vpop.f32.mrb[0].mxu0
    %v784 = vadd.f32 %v704, %v783
    %v785 = vpop.f32.mrb[0].mxu0
    %786 = vdwg.mxu0
    %v787 = vmax.f32 %v784, 0.0
    %v788 = vlaneseq
    %v789 = vshrl.u32 %v788, 7
    %v790 = vsub.s32 0, %v789
    %v791 = vrot.slane %v104, %v790
    %v792 = vmul.f32 %v787, %v791
    %vm793 = vcmask 74752
    %v794 = vsel %vm793, %v792, 0.0
    %795 = vadd.xlane.f32.xlu0 %v794
    %v796 = vpop.xlane.xlu0 %795
    %v797 = vstv %s91
    %v798 = vadd.f32 %v796, %v797
    %v799 = vsub.f32 0.0, %v798
    %v800 = vmul.f32 %v799, 1.442695
    %v801 = vpow.pop %v800
    %v802 = vadd.f32 %v801, 1.0
    %v803 = vrcp.pop %v802
    %vm804 = vcmask 1024
    %805 = vst.msk [vmem:[%s3] sm:$0x3] %vm804, %v803
    // Predicated region
    $region18: #{model_forward.2} parent=1 // pred_check
      _
    $region19: #{model_forward.2} parent=1 // pred_check_branch
      %807 = sbr.rel (0) target = $region21
    $region20: #{model_forward.2} parent=1 // pred_region
      _
    $region21: #{model_forward.2} parent=1 // pred_fallthru
      _
    // Predicated region
    $region22: #{model_forward.2} parent=1 // pred_check
      _
    $region23: #{model_forward.2} parent=1 // pred_check_branch
      %809 = sbr.rel (0) target = $region25
    $region24: #{model_forward.2} parent=1 // pred_region
      _
    $region25: #{model_forward.2} parent=1 // pred_fallthru
      _
    %810 = vsyncpa [#allocation3], 1

</llo_original>
